<compile_context>
chip_gen: v7x
topology: tpu7x:2x2x1
jax: 0.10.0
libtpu: 0.0.40
codegen_flags: <defaults>
</compile_context>

<pallas_src>
import jax
import jax.numpy as jnp
from jax.experimental import pallas as pl
from jax.experimental.pallas import tpu as pltpu

_LANES = 128


def _round_up(x, m):
    return ((x + m - 1) // m) * m


def _fused_mlp_kernel(x_ref, *rest):
    """rest = (w0, b0, w1, b1, ..., o_ref).

    Computes relu(... relu(x @ w0 + b0) ...) with bf16 MXU matmuls and f32
    accumulation; the whole layer chain stays in VMEM/vregs.
    """
    *wb, o_ref = rest
    n_layers = len(wb) // 2
    compute_dtype = wb[0].dtype
    h = x_ref[...].astype(compute_dtype)                 # in-kernel cast (no XLA pass on x)
    for l in range(n_layers):
        w = wb[2 * l][...]                               # (d_in_pad, d_out_pad), bf16
        b = wb[2 * l + 1][...]                           # (1, d_out_pad), f32 row broadcast
        acc = jnp.dot(h, w, preferred_element_type=jnp.float32) + b   # MXU, f32 acc
        acc = jnp.maximum(acc, 0.0)                      # ReLU epilogue in VMEM
        h = acc.astype(compute_dtype) if l + 1 < n_layers else acc
    o_ref[...] = h.astype(o_ref.dtype)


def pack_mlp_params(weights, biases, *, compute_dtype=jnp.bfloat16):
    """Pad feature dims to multiples of 128 (lane axis) and cast to the MXU
    compute dtype ONCE, outside the per-call hot path.

    Zero padding is exact for Linear+ReLU: padded input columns only ever hit
    zero weight rows; padded output columns have zero weights + zero bias, so
    they stay 0 through ReLU and the next layer.
    """
    dims = [int(weights[0].shape[0])] + [int(w.shape[1]) for w in weights]
    assert len(weights) == len(biases)
    ws, bs = [], []
    for l, (w, b) in enumerate(zip(weights, biases)):
        assert w.shape == (dims[l], dims[l + 1]) and b.shape == (dims[l + 1],)
        # Layer 0 keeps the raw obs_dim on its contraction axis so obs needs no
        # feature padding; deeper layers match the previous layer's padded width.
        din = dims[l] if l == 0 else _round_up(dims[l], _LANES)
        dout = _round_up(dims[l + 1], _LANES)
        w_p = jnp.zeros((din, dout), compute_dtype).at[: dims[l], : dims[l + 1]].set(
            w.astype(compute_dtype))
        b_p = jnp.zeros((1, dout), jnp.float32).at[0, : dims[l + 1]].set(
            b.astype(jnp.float32))
        ws.append(w_p)
        bs.append(b_p)
    return tuple(dims), tuple(ws), tuple(bs)


def mlp_obs_encoder_forward(obs, packed_ws, packed_bs, *, out_dim, block_rows=1024):
    """obs: [B, obs_dim] (f32); packed_ws/packed_bs from pack_mlp_params."""
    B, D0 = obs.shape
    assert int(packed_ws[0].shape[0]) == D0
    compute_dtype = packed_ws[0].dtype
    d_out_pad = int(packed_ws[-1].shape[1])
    out_dtype = obs.dtype

    # Row tile: multiple of the sublane packing (16 rows for bf16 compute);
    # when there is enough batch, keep at least two grid steps so v7x's second
    # TensorCore gets work (no-op on single-core v5e/v6e).
    sub = 16 if jnp.dtype(compute_dtype).itemsize < 4 else 8
    block_rows = max(sub, _round_up(int(block_rows), sub))
    if B > sub:
        tb = min(block_rows, _round_up(pl.cdiv(_round_up(B, sub), 2), sub))
    else:
        tb = sub
    grid = (pl.cdiv(B, tb),)

    in_specs = [pl.BlockSpec((tb, D0), lambda i: (i, 0))]
    args = [obs]
    for w_p, b_p in zip(packed_ws, packed_bs):
        # Constant index maps -> weights/biases stay VMEM-resident across grid
        # steps. Single-buffer very large weights (matters on v7x's 64 MiB VMEM).
        big = int(w_p.size) * w_p.dtype.itemsize >= (8 << 20)
        if big:
            w_spec = pl.BlockSpec(w_p.shape, lambda i: (0, 0),
                                  pipeline_mode=pl.Buffered(1))
        else:
            w_spec = pl.BlockSpec(w_p.shape, lambda i: (0, 0))
        in_specs += [w_spec, pl.BlockSpec(b_p.shape, lambda i: (0, 0))]
        args += [w_p, b_p]

    # Advisory numbers for XLA scheduling and the scoped-VMEM budget.
    flops = 2 * B * sum(int(w.shape[0]) * int(w.shape[1]) for w in packed_ws)
    param_bytes = (sum(int(w.size) * w.dtype.itemsize for w in packed_ws)
                   + sum(int(b.size) * b.dtype.itemsize for b in packed_bs))
    bytes_accessed = (B * D0 * obs.dtype.itemsize + param_bytes
                      + B * d_out_pad * jnp.dtype(out_dtype).itemsize)
    vmem_needed = (2 * tb * D0 * obs.dtype.itemsize                       # x tile (double buf)
                   + 2 * tb * d_out_pad * jnp.dtype(out_dtype).itemsize   # out tile (double buf)
                   + 2 * param_bytes                                      # resident params
                   + (2 << 20))                                           # slack
    vmem_limit = int(min(max(vmem_needed, 32 << 20), 48 << 20))           # < v7x 64 MiB physical

    out_p = pl.pallas_call(
        _fused_mlp_kernel,
        out_shape=jax.ShapeDtypeStruct((B, d_out_pad), out_dtype),
        grid=grid,
        in_specs=in_specs,
        out_specs=pl.BlockSpec((tb, d_out_pad), lambda i: (i, 0)),
        compiler_params=pltpu.CompilerParams(
            dimension_semantics=("parallel",),
            vmem_limit_bytes=vmem_limit,
        ),
        cost_estimate=pl.CostEstimate(
            flops=flops, transcendentals=0, bytes_accessed=bytes_accessed),
    )(*args)

    # Only the lane padding of the last layer is sliced off; no row padding exists.
    return out_p if out_dim == d_out_pad else out_p[:, :out_dim]


if __name__ == "__main__":
    # Module config: obs_dim=64, cfg.MODEL.TRANSFORMER.EXT_HIDDEN_DIMS=[64, 64], batch=2.
    B, obs_dim = 2, 64
    hidden_dims = [64, 64]
    dims = [obs_dim] + hidden_dims

    key = jax.random.PRNGKey(0)
    key, kx = jax.random.split(key)
    obs = jax.random.normal(kx, (B, obs_dim), dtype=jnp.float32)

    weights, biases = [], []
    for l in range(len(dims) - 1):
        key, kw, kb = jax.random.split(key, 3)
        bound = 1.0 / (dims[l] ** 0.5)   # PyTorch nn.Linear default init scale
        weights.append(
            jax.random.uniform(kw, (dims[l], dims[l + 1]),
                               minval=-bound, maxval=bound, dtype=jnp.float32))
        biases.append(
            jax.random.uniform(kb, (dims[l + 1],),
                               minval=-bound, maxval=bound, dtype=jnp.float32))

    # Pad + cast parameters ONCE, outside the per-step path.
    true_dims, ws, bs = pack_mlp_params(weights, biases, compute_dtype=jnp.bfloat16)

    fwd = jax.jit(mlp_obs_encoder_forward, static_argnames=("out_dim", "block_rows"))
    out = fwd(obs, ws, bs, out_dim=true_dims[-1])
    out = jax.block_until_ready(out)
    assert out.shape == (B, dims[-1]), out.shape

    # Pure-JAX f32 reference (kernel uses bf16 operands with f32 accumulation,
    # hence the loose tolerance).
    ref = obs
    for w, b in zip(weights, biases):
        ref = jnp.maximum(
            jnp.dot(ref, w, precision=jax.lax.Precision.HIGHEST) + b, 0.0)
    err = float(jnp.max(jnp.abs(out - ref)))
    assert jnp.allclose(out, ref, atol=3e-2, rtol=3e-2), f"max abs err = {err}"

    print("KERNEL_OK")
</pallas_src>

<mosaic_0001>
module attributes {stable_mosaic.version = 11 : i64} {
  func.func @_fused_mlp_kernel(%arg0: i32, %arg1: memref<16x64xf32, #tpu.memory_space<vmem>>, %arg2: memref<64x128xbf16, #tpu.memory_space<vmem>>, %arg3: memref<1x128xf32, #tpu.memory_space<vmem>>, %arg4: memref<128x128xbf16, #tpu.memory_space<vmem>>, %arg5: memref<1x128xf32, #tpu.memory_space<vmem>>, %arg6: memref<16x128xf32, #tpu.memory_space<vmem>>) attributes {dimension_semantics = [#tpu.dimension_semantics<parallel>], iteration_bounds = array<i64: 1>, scalar_prefetch = 0 : i64, scratch_operands = 0 : i64, tpu.core_type = #tpu.core_type<tc>, window_params = [{transform_indices = @transform_0, window_bounds = array<i64: 16, 64>}, {pipeline_mode = #tpu.pipeline_mode<synchronous>, transform_indices = @transform_1, window_bounds = array<i64: 64, 128>}, {pipeline_mode = #tpu.pipeline_mode<synchronous>, transform_indices = @transform_2, window_bounds = array<i64: 1, 128>}, {pipeline_mode = #tpu.pipeline_mode<synchronous>, transform_indices = @transform_3, window_bounds = array<i64: 128, 128>}, {pipeline_mode = #tpu.pipeline_mode<synchronous>, transform_indices = @transform_4, window_bounds = array<i64: 1, 128>}, {transform_indices = @transform_5, window_bounds = array<i64: 16, 128>}]} {
    %c0 = arith.constant 0 : index
    %c0_0 = arith.constant 0 : index
    %0 = vector.load %arg1[%c0, %c0_0] : memref<16x64xf32, #tpu.memory_space<vmem>>, vector<16x64xf32>
    %1 = arith.truncf %0 : vector<16x64xf32> to vector<16x64xbf16>
    %c0_1 = arith.constant 0 : index
    %c0_2 = arith.constant 0 : index
    %2 = vector.load %arg2[%c0_1, %c0_2] : memref<64x128xbf16, #tpu.memory_space<vmem>>, vector<64x128xbf16>
    %c0_3 = arith.constant 0 : index
    %c0_4 = arith.constant 0 : index
    %3 = vector.load %arg3[%c0_3, %c0_4] : memref<1x128xf32, #tpu.memory_space<vmem>>, vector<1x128xf32>
    %cst = arith.constant dense<0.000000e+00> : vector<16x128xf32>
    %4 = tpu.matmul %1, %2, %cst {dimension_numbers = #tpu.dot_dimension_numbers<[1], [0], [0], [1], [0, 0, 1, 1], [], []>} : vector<16x64xbf16>, vector<64x128xbf16>, vector<16x128xf32> -> vector<16x128xf32>
    %5 = vector.broadcast %3 : vector<1x128xf32> to vector<16x128xf32>
    %6 = arith.addf %4, %5 : vector<16x128xf32>
    %cst_5 = arith.constant 0.000000e+00 : f32
    %7 = vector.broadcast %cst_5 : f32 to vector<16x128xf32>
    %8 = arith.maximumf %6, %7 : vector<16x128xf32>
    %9 = arith.truncf %8 : vector<16x128xf32> to vector<16x128xbf16>
    %c0_6 = arith.constant 0 : index
    %c0_7 = arith.constant 0 : index
    %10 = vector.load %arg4[%c0_6, %c0_7] : memref<128x128xbf16, #tpu.memory_space<vmem>>, vector<128x128xbf16>
    %c0_8 = arith.constant 0 : index
    %c0_9 = arith.constant 0 : index
    %11 = vector.load %arg5[%c0_8, %c0_9] : memref<1x128xf32, #tpu.memory_space<vmem>>, vector<1x128xf32>
    %cst_10 = arith.constant dense<0.000000e+00> : vector<16x128xf32>
    %12 = tpu.matmul %9, %10, %cst_10 {dimension_numbers = #tpu.dot_dimension_numbers<[1], [0], [0], [1], [0, 0, 1, 1], [], []>} : vector<16x128xbf16>, vector<128x128xbf16>, vector<16x128xf32> -> vector<16x128xf32>
    %13 = vector.broadcast %11 : vector<1x128xf32> to vector<16x128xf32>
    %14 = arith.addf %12, %13 : vector<16x128xf32>
    %cst_11 = arith.constant 0.000000e+00 : f32
    %15 = vector.broadcast %cst_11 : f32 to vector<16x128xf32>
    %16 = arith.maximumf %14, %15 : vector<16x128xf32>
    %c0_12 = arith.constant 0 : index
    %c0_13 = arith.constant 0 : index
    %17 = vector.load %arg6[%c0_12, %c0_13] : memref<16x128xf32, #tpu.memory_space<vmem>>, vector<16x128xf32>
    tpu.vector_store %arg6[%c0_12, %c0_13], %16 {strides = array<i32>} : memref<16x128xf32, #tpu.memory_space<vmem>>, vector<16x128xf32>,
    return
  }
  func.func @transform_0(%arg0: i32) -> (i32, i32) {
    %c0_i32 = arith.constant 0 : i32
    %c0_i32_0 = arith.constant 0 : i32
    return %arg0, %c0_i32 : i32, i32
  }
  func.func @transform_1(%arg0: i32) -> (i32, i32) {
    %c0_i32 = arith.constant 0 : i32
    %c0_i32_0 = arith.constant 0 : i32
    %c0_i32_1 = arith.constant 0 : i32
    return %c0_i32, %c0_i32_0 : i32, i32
  }
  func.func @transform_2(%arg0: i32) -> (i32, i32) {
    %c0_i32 = arith.constant 0 : i32
    %c0_i32_0 = arith.constant 0 : i32
    %c0_i32_1 = arith.constant 0 : i32
    return %c0_i32, %c0_i32_0 : i32, i32
  }
  func.func @transform_3(%arg0: i32) -> (i32, i32) {
    %c0_i32 = arith.constant 0 : i32
    %c0_i32_0 = arith.constant 0 : i32
    %c0_i32_1 = arith.constant 0 : i32
    return %c0_i32, %c0_i32_0 : i32, i32
  }
  func.func @transform_4(%arg0: i32) -> (i32, i32) {
    %c0_i32 = arith.constant 0 : i32
    %c0_i32_0 = arith.constant 0 : i32
    %c0_i32_1 = arith.constant 0 : i32
    return %c0_i32, %c0_i32_0 : i32, i32
  }
  func.func @transform_5(%arg0: i32) -> (i32, i32) {
    %c0_i32 = arith.constant 0 : i32
    %c0_i32_0 = arith.constant 0 : i32
    return %arg0, %c0_i32 : i32, i32
  }
}

</mosaic_0001>

<llo_original>
// kernel: mlp_obs_encoder_forward.1
$region0: #{mlp_obs_encoder_forward.1}
  #allocation0 [shape = 'u32[]', space=smem, size = 0x4, offset = 0x4, fixed_abs, tag = 'smem constant byte address 0x4 - core index']
  #allocation1 [shape = 'u32[144,128]{1,0:T(1,128)}', space=vmem, size = 0x12000, scoped, tag = 'internal scratch']
  %s0 = inlined_call_operand.hbm [shape: f32[2,64], index: 0, kind: input, shape index: {}]
  %s1 = inlined_call_operand.hbm [shape: bf16[64,128], index: 1, kind: input, shape index: {}]
  %s2 = inlined_call_operand.vmem [shape: f32[1,128], index: 2, kind: input, shape index: {}]
  %s3 = inlined_call_operand.hbm [shape: bf16[128,128], index: 3, kind: input, shape index: {}]
  %s4 = inlined_call_operand.vmem [shape: f32[1,128], index: 4, kind: input, shape index: {}]
  %s5 = inlined_call_operand.hbm [shape: f32[2,128], index: 5, kind: output, shape index: {}]
  %s6 = sld [smem:[#allocation0]]
  $region42: #{mlp_obs_encoder_forward.1} parent=0
    _
  %s8 = ssub.s32 1, %s6
  %s9 = scalar_select 0, %s8, %s6
  $region1: #{mlp_obs_encoder_forward.1} parent=0
    #allocation2 [shape = 'u8[8192]{0}', space=vmem, size = 0x2000, scoped, tag = 'input window, operand 0, single buffered']
    #allocation3 [shape = 's32[1]{0}', space=sflag, size = 0x4, scoped, tag = 'scoped memory for mlp_obs_encoder_forward.1']
    #allocation4 [shape = 's32[1]{0}', space=sflag, size = 0x4, scoped, tag = 'scoped memory for mlp_obs_encoder_forward.1']
    #allocation5 [shape = 'u8[16384]{0}', space=vmem, size = 0x4000, scoped, tag = 'input window, operand 1, single buffered']
    #allocation6 [shape = 's32[1]{0}', space=sflag, size = 0x4, scoped, tag = 'scoped memory for mlp_obs_encoder_forward.1']
    #allocation7 [shape = 'u8[32768]{0}', space=vmem, size = 0x8000, scoped, tag = 'input window, operand 3, single buffered']
    #allocation8 [shape = 'u8[8192]{0}', space=vmem, size = 0x2000, scoped, tag = 'output window, operand 0, single buffered']
    %10 = vsyncpa [#allocation3], 0
    %11 = vsyncpa [#allocation6], 0
    %12 = vsyncpa [#allocation4], 0
    // Predicated region
    $region2: #{mlp_obs_encoder_forward.1} parent=1 // pred_check
      _
    $region3: #{mlp_obs_encoder_forward.1} parent=1 // pred_check_branch
      %14 = sbr.rel (0) target = $region5
    $region4: #{mlp_obs_encoder_forward.1} parent=1 // pred_region
      %s16 = ssub.s32 256, 32
      %17 = vsyncadd [#allocation3], %s16
      %s18 = sshll.u32 [#allocation2], 4
      %s19 = int_to_ptr.vmem [resolvable:$true] %s18
      %24 = dma.hbm_to_vmem [thread:$0]  %s0, 32, %s19, [#allocation3], 32, 32, 2
    $region5: #{mlp_obs_encoder_forward.1} parent=1 // pred_fallthru
      _
    // Predicated region
    $region6: #{mlp_obs_encoder_forward.1} parent=1 // pred_check
      _
    $region7: #{mlp_obs_encoder_forward.1} parent=1 // pred_check_branch
      %26 = sbr.rel (0) target = $region9
    $region8: #{mlp_obs_encoder_forward.1} parent=1 // pred_region
      %s28 = ssub.s32 512, 512
      %29 = vsyncadd [#allocation6], %s28
      %s30 = sshll.u32 [#allocation5], 4
      %s31 = int_to_ptr.vmem [resolvable:$true] %s30
      %36 = dma.hbm_to_vmem [thread:$0]  %s1, 512, %s31, [#allocation6], 64, 64, 4
    $region9: #{mlp_obs_encoder_forward.1} parent=1 // pred_fallthru
      _
    // Predicated region
    $region10: #{mlp_obs_encoder_forward.1} parent=1 // pred_check
      _
    $region11: #{mlp_obs_encoder_forward.1} parent=1 // pred_check_branch
      %38 = sbr.rel (0) target = $region13
    $region12: #{mlp_obs_encoder_forward.1} parent=1 // pred_region
      _
    $region13: #{mlp_obs_encoder_forward.1} parent=1 // pred_fallthru
      _
    // Predicated region
    $region14: #{mlp_obs_encoder_forward.1} parent=1 // pred_check
      _
    $region15: #{mlp_obs_encoder_forward.1} parent=1 // pred_check_branch
      %40 = sbr.rel (0) target = $region17
    $region16: #{mlp_obs_encoder_forward.1} parent=1 // pred_region
      %s42 = ssub.s32 1024, 1024
      %43 = vsyncadd [#allocation6], %s42
      %s44 = sshll.u32 [#allocation7], 4
      %s45 = int_to_ptr.vmem [resolvable:$true] %s44
      %50 = dma.hbm_to_vmem [thread:$0]  %s3, 1024, %s45, [#allocation6], 64, 64, 4
    $region17: #{mlp_obs_encoder_forward.1} parent=1 // pred_fallthru
      _
    // Predicated region
    $region18: #{mlp_obs_encoder_forward.1} parent=1 // pred_check
      _
    $region19: #{mlp_obs_encoder_forward.1} parent=1 // pred_check_branch
      %52 = sbr.rel (0) target = $region21
    $region20: #{mlp_obs_encoder_forward.1} parent=1 // pred_region
      _
    $region21: #{mlp_obs_encoder_forward.1} parent=1 // pred_fallthru
      _
    // Predicated region
    $region22: #{mlp_obs_encoder_forward.1} parent=1 // pred_check
      _
    $region23: #{mlp_obs_encoder_forward.1} parent=1 // pred_check_branch
      %54 = sbr.rel (0) target = $region25
    $region24: #{mlp_obs_encoder_forward.1} parent=1 // pred_region
      %55 = dma.done [#allocation3], 256
    $region25: #{mlp_obs_encoder_forward.1} parent=1 // pred_fallthru
      _
    // Predicated region
    $region26: #{mlp_obs_encoder_forward.1} parent=1 // pred_check
      _
    $region27: #{mlp_obs_encoder_forward.1} parent=1 // pred_check_branch
      %57 = sbr.rel (0) target = $region29
    $region28: #{mlp_obs_encoder_forward.1} parent=1 // pred_region
      %58 = dma.done [#allocation6], 512
    $region29: #{mlp_obs_encoder_forward.1} parent=1 // pred_fallthru
      _
    // Predicated region
    $region30: #{mlp_obs_encoder_forward.1} parent=1 // pred_check
      _
    $region31: #{mlp_obs_encoder_forward.1} parent=1 // pred_check_branch
      %60 = sbr.rel (0) target = $region33
    $region32: #{mlp_obs_encoder_forward.1} parent=1 // pred_region
      %61 = dma.done [#allocation6], 1024
    $region33: #{mlp_obs_encoder_forward.1} parent=1 // pred_fallthru
      _
    %v63 = vld [vmem:[#allocation2] sm:$0xff]
    %v64 = vld [vmem:[#allocation2 + $0x8] sm:$0xff]
    %v65 = vpack.c.bf16 %v64, %v63
    %v66 = vld [vmem:[#allocation5] sm:$0xf]
    %v67 = vld [vmem:[#allocation5 + $0x4] sm:$0xf]
    %v68 = vld [vmem:[#allocation5 + $0x8] sm:$0xf]
    %v69 = vld [vmem:[#allocation5 + $0xc] sm:$0xf]
    %v70 = vld [vmem:[#allocation5 + $0x10] sm:$0xf]
    %v71 = vld [vmem:[#allocation5 + $0x14] sm:$0xf]
    %v72 = vld [vmem:[#allocation5 + $0x18] sm:$0xf]
    %v73 = vld [vmem:[#allocation5 + $0x1c] sm:$0xf]
    %v74 = vld [vmem:[%s2] sm:$0x1]
    %v76 = vlaneseq
    %v77 = vshrl.u32 %v76, 7
    %v78 = vsub.s32 0, %v77
    %v79 = vrot.slane %v74, %v78
    %v89 = vunpack.c.l.b16 %v66
    %v90 = vunpack.c.l.b16 %v67
    %v91 = vunpack.c.l.b16 %v68
    %v92 = vunpack.c.l.b16 %v69
    %v93 = vunpack.c.l.b16 %v70
    %v94 = vunpack.c.l.b16 %v71
    %v95 = vunpack.c.l.b16 %v72
    %v96 = vunpack.c.l.b16 %v73
    %v97 = vpack.c.b16 %v90, %v89
    %v98 = vpack.c.b16 %v92, %v91
    %v99 = vpack.c.b16 %v94, %v93
    %v100 = vpack.c.b16 %v96, %v95
    %vm105 = vcmask 523264
    %v107 = vsel %vm105, %v65, 0
    %109 = vmatprep.subr.bf16.mxu0 0
    %110 = vmatpush1.bf16.msra.mxu0 %v97
    %111 = vmatprep.subr.bf16.mxu0 0
    %112 = vmatpush1.bf16.msra.mxu0 %v98
    %113 = vmatprep.subr.bf16.mxu0 0
    %114 = vmatpush1.bf16.msra.mxu0 %v99
    %115 = vmatprep.subr.bf16.mxu0 0
    %116 = vmatpush1.bf16.msra.mxu0 %v100
    %117 = vmatprep.subr.bf16.mxu0 0
    %118 = vmatpush1.bf16.msra.mxu0 0
    %119 = vmatprep.subr.bf16.mxu0 0
    %120 = vmatpush1.bf16.msra.mxu0 0
    %121 = vmatprep.subr.bf16.mxu0 0
    %122 = vmatpush1.bf16.msra.mxu0 0
    %123 = vmatprep.subr.bf16.mxu0 0
    %124 = vmatpush1.bf16.msra.mxu0 0
    %125 = vmatprep.subr.bf16.mxu0 0
    %126 = vmatpush1.bf16.msra.mxu0 0
    %127 = vmatprep.subr.bf16.mxu0 0
    %128 = vmatpush1.bf16.msra.mxu0 0
    %129 = vmatprep.subr.bf16.mxu0 0
    %130 = vmatpush1.bf16.msra.mxu0 0
    %131 = vmatprep.subr.bf16.mxu0 0
    %132 = vmatpush1.bf16.msra.mxu0 0
    %133 = vmatprep.subr.bf16.mxu0 0
    %134 = vmatpush1.bf16.msra.mxu0 0
    %135 = vmatprep.subr.bf16.mxu0 0
    %136 = vmatpush1.bf16.msra.mxu0 0
    %137 = vmatprep.subr.bf16.mxu0 0
    %138 = vmatpush1.bf16.msra.mxu0 0
    %139 = vmatprep.subr.bf16.mxu0 0
    %140 = vmatpush1.bf16.msra.mxu0 0
    %141 = vmatprep.mubr.bf16.mxu0 0
    %142 = vmatmul.mubr.bf16.gmra.mrb[0].mxu0 %v107
    %v143 = vpop.f32.mrb[0].mxu0
    %v144 = vadd.f32 %v79, %v143
    %v145 = vpop.f32.mrb[0].mxu0
    %v146 = vpop.f32.mrb[0].mxu0
    %v147 = vadd.f32 %v79, %v146
    %v148 = vpop.f32.mrb[0].mxu0
    %149 = vdwg.mxu0
    %v150 = vmax.f32 %v144, 0.0
    %v151 = vmax.f32 %v147, 0.0
    %v152 = vpack.c.bf16 %v151, %v150
    %v153 = vld [vmem:[#allocation7] sm:$0xf]
    %v154 = vld [vmem:[#allocation7 + $0x4] sm:$0xf]
    %v155 = vld [vmem:[#allocation7 + $0x8] sm:$0xf]
    %v156 = vld [vmem:[#allocation7 + $0xc] sm:$0xf]
    %v157 = vld [vmem:[#allocation7 + $0x10] sm:$0xf]
    %v158 = vld [vmem:[#allocation7 + $0x14] sm:$0xf]
    %v159 = vld [vmem:[#allocation7 + $0x18] sm:$0xf]
    %v160 = vld [vmem:[#allocation7 + $0x1c] sm:$0xf]
    %v161 = vld [vmem:[#allocation7 + $0x20] sm:$0xf]
    %v162 = vld [vmem:[#allocation7 + $0x24] sm:$0xf]
    %v163 = vld [vmem:[#allocation7 + $0x28] sm:$0xf]
    %v164 = vld [vmem:[#allocation7 + $0x2c] sm:$0xf]
    %v165 = vld [vmem:[#allocation7 + $0x30] sm:$0xf]
    %v166 = vld [vmem:[#allocation7 + $0x34] sm:$0xf]
    %v167 = vld [vmem:[#allocation7 + $0x38] sm:$0xf]
    %v168 = vld [vmem:[#allocation7 + $0x3c] sm:$0xf]
    %v169 = vld [vmem:[%s4] sm:$0x1]
    %v171 = vlaneseq
    %v172 = vshrl.u32 %v171, 7
    %v173 = vsub.s32 0, %v172
    %v174 = vrot.slane %v169, %v173
    %v192 = vunpack.c.l.b16 %v153
    %v193 = vunpack.c.l.b16 %v154
    %v194 = vunpack.c.l.b16 %v155
    %v195 = vunpack.c.l.b16 %v156
    %v196 = vunpack.c.l.b16 %v157
    %v197 = vunpack.c.l.b16 %v158
    %v198 = vunpack.c.l.b16 %v159
    %v199 = vunpack.c.l.b16 %v160
    %v200 = vunpack.c.l.b16 %v161
    %v201 = vunpack.c.l.b16 %v162
    %v202 = vunpack.c.l.b16 %v163
    %v203 = vunpack.c.l.b16 %v164
    %v204 = vunpack.c.l.b16 %v165
    %v205 = vunpack.c.l.b16 %v166
    %v206 = vunpack.c.l.b16 %v167
    %v207 = vunpack.c.l.b16 %v168
    %v208 = vpack.c.b16 %v193, %v192
    %v209 = vpack.c.b16 %v195, %v194
    %v210 = vpack.c.b16 %v197, %v196
    %v211 = vpack.c.b16 %v199, %v198
    %v212 = vpack.c.b16 %v201, %v200
    %v213 = vpack.c.b16 %v203, %v202
    %v214 = vpack.c.b16 %v205, %v204
    %v215 = vpack.c.b16 %v207, %v206
    %224 = vmatprep.subr.bf16.mxu0 0
    %225 = vmatpush1.bf16.msra.mxu0 %v208
    %226 = vmatprep.subr.bf16.mxu0 0
    %227 = vmatpush1.bf16.msra.mxu0 %v209
    %228 = vmatprep.subr.bf16.mxu0 0
    %229 = vmatpush1.bf16.msra.mxu0 %v210
    %230 = vmatprep.subr.bf16.mxu0 0
    %231 = vmatpush1.bf16.msra.mxu0 %v211
    %232 = vmatprep.subr.bf16.mxu0 0
    %233 = vmatpush1.bf16.msra.mxu0 %v212
    %234 = vmatprep.subr.bf16.mxu0 0
    %235 = vmatpush1.bf16.msra.mxu0 %v213
    %236 = vmatprep.subr.bf16.mxu0 0
    %237 = vmatpush1.bf16.msra.mxu0 %v214
    %238 = vmatprep.subr.bf16.mxu0 0
    %239 = vmatpush1.bf16.msra.mxu0 %v215
    %240 = vmatprep.subr.bf16.mxu0 0
    %241 = vmatpush1.bf16.msra.mxu0 0
    %242 = vmatprep.subr.bf16.mxu0 0
    %243 = vmatpush1.bf16.msra.mxu0 0
    %244 = vmatprep.subr.bf16.mxu0 0
    %245 = vmatpush1.bf16.msra.mxu0 0
    %246 = vmatprep.subr.bf16.mxu0 0
    %247 = vmatpush1.bf16.msra.mxu0 0
    %248 = vmatprep.subr.bf16.mxu0 0
    %249 = vmatpush1.bf16.msra.mxu0 0
    %250 = vmatprep.subr.bf16.mxu0 0
    %251 = vmatpush1.bf16.msra.mxu0 0
    %252 = vmatprep.subr.bf16.mxu0 0
    %253 = vmatpush1.bf16.msra.mxu0 0
    %254 = vmatprep.subr.bf16.mxu0 0
    %255 = vmatpush1.bf16.msra.mxu0 0
    %256 = vmatprep.mubr.bf16.mxu0 0
    %257 = vmatmul.mubr.bf16.gmra.mrb[0].mxu0 %v152
    %v258 = vpop.f32.mrb[0].mxu0
    %v259 = vadd.f32 %v174, %v258
    %v260 = vpop.f32.mrb[0].mxu0
    %v261 = vpop.f32.mrb[0].mxu0
    %v262 = vadd.f32 %v174, %v261
    %v263 = vpop.f32.mrb[0].mxu0
    %264 = vdwg.mxu0
    %v265 = vmax.f32 %v259, 0.0
    %v266 = vmax.f32 %v262, 0.0
    %267 = vst [vmem:[#allocation8] sm:$0xff] %v265
    %268 = vst [vmem:[#allocation8 + $0x8] sm:$0xff] %v266
    // Predicated region
    $region34: #{mlp_obs_encoder_forward.1} parent=1 // pred_check
      _
    $region35: #{mlp_obs_encoder_forward.1} parent=1 // pred_check_branch
      %270 = sbr.rel (0) target = $region37
    $region36: #{mlp_obs_encoder_forward.1} parent=1 // pred_region
      %s272 = ssub.s32 256, 32
      %273 = vsyncadd [#allocation4], %s272
      %s274 = sshll.u32 [#allocation8], 4
      %s275 = int_to_ptr.vmem [resolvable:$true] %s274
      %280 = dma.vmem_to_hbm [thread:$0]  %s275, 32, %s5, [#allocation4], 32, 32, 2
    $region37: #{mlp_obs_encoder_forward.1} parent=1 // pred_fallthru
      _
    // Predicated region
    $region38: #{mlp_obs_encoder_forward.1} parent=1 // pred_check
      _
    $region39: #{mlp_obs_encoder_forward.1} parent=1 // pred_check_branch
      %282 = sbr.rel (0) target = $region41
    $region40: #{mlp_obs_encoder_forward.1} parent=1 // pred_region
      %283 = dma.done [#allocation4], 256
    $region41: #{mlp_obs_encoder_forward.1} parent=1 // pred_fallthru
      _
    %284 = vsyncpa [#allocation3], 1
    %285 = vsyncpa [#allocation6], 1
    %286 = vsyncpa [#allocation4], 1

</llo_original>
